<compile_context>
chip_gen: v7x
topology: tpu7x:2x2x1
jax: 0.10.0
libtpu: 0.0.40
codegen_flags: <defaults>
</compile_context>

<pallas_src>
import jax
import jax.numpy as jnp
from jax.experimental import pallas as pl
from jax.experimental.pallas import tpu as pltpu


_SINGLE_BLOCK_MAX_BYTES = 512 * 1024  # below this, one resident block (overhead irrelevant)


def _soft_threshold_kernel(lam_ref, k_ref, o_ref):
    """Elementwise soft-threshold: relu(|k| - lam) * sign(k) == k - clip(k, -lam, lam), lam >= 0."""
    lam = lam_ref[0]
    k = k_ref[...]
    o_ref[...] = k - jnp.clip(k, -lam, lam)


def _default_target_block_bytes():
    """Generation-aware block budget: keep ~4x block (double-buffered in+out) well under VMEM."""
    vmem = 64 << 20  # assume the smallest (v7x: 64 MiB per TensorCore) if query fails
    try:
        info = pltpu.get_tpu_info()
        vmem = int(getattr(info, "vmem_capacity_bytes", vmem)) or vmem
    except Exception:
        pass
    # v5e/v6e (128 MiB) -> 8 MiB blocks; v7x (64 MiB) -> 4 MiB blocks.
    return max(1 << 20, min(8 << 20, vmem // 16))


def _lane_dense_2d_shape(C, H, L):
    """Pick a lane-dense 2-D view of the flattened (C*H*L,) tensor (elementwise op => free)."""
    total = C * H * L
    if L % 128 == 0:
        return C * H, L
    for w in (1024, 512, 256, 128):
        if total % w == 0:
            return total // w, w
    return C * H, L  # fallback: masked partial stores, still correct


def _pick_block_rows(rows, target_rows):
    """Largest multiple-of-8 row tile <= target; prefer an exact divisor of rows (no ragged tail)."""
    if rows <= 8:
        return rows
    target_rows = max(8, min((target_rows // 8) * 8, (rows // 8) * 8))
    for br in range(target_rows, 7, -8):
        if rows % br == 0:
            return br
    return target_rows


def long_conv_kernel_forward(kernel_params, lam=0.1, target_block_bytes=None):
    """JAX/Pallas equivalent of LongConvKernel.forward() with weight_init='random'.

    Args:
      kernel_params: (channels, H, L) float32 array (the learned long-conv kernel).
      lam: non-negative soft-threshold parameter (module default 0.1), passed as an SMEM scalar.
      target_block_bytes: per-block VMEM budget; default is generation-aware.

    Returns:
      (prox_kernel, None) matching the PyTorch module's return signature.
    """
    assert lam >= 0.0, "lam must be non-negative for the soft-threshold rewrite k - clip(k,-lam,lam)"
    C, H, L = kernel_params.shape
    if target_block_bytes is None:
        target_block_bytes = _default_target_block_bytes()

    rows, cols = _lane_dense_2d_shape(C, H, L)
    x2d = kernel_params.reshape(rows, cols)
    itemsize = x2d.dtype.itemsize
    bytes_per_row = cols * itemsize
    total_elems = rows * cols
    total_bytes = total_elems * itemsize

    lam_arr = jnp.full((1,), lam, dtype=x2d.dtype)
    out_shape = jax.ShapeDtypeStruct((rows, cols), x2d.dtype)
    smem_spec = pl.BlockSpec(memory_space=pltpu.MemorySpace.SMEM)
    cost = pl.CostEstimate(flops=3 * total_elems, transcendentals=0,
                           bytes_accessed=2 * total_elems * itemsize)

    if total_bytes <= min(target_block_bytes, _SINGLE_BLOCK_MAX_BYTES):
        # Tiny tensor: whole array in one VMEM-resident block, zero grid overhead.
        out2d = pl.pallas_call(
            _soft_threshold_kernel,
            out_shape=out_shape,
            in_specs=[smem_spec, pl.BlockSpec(memory_space=pltpu.MemorySpace.VMEM)],
            out_specs=pl.BlockSpec(memory_space=pltpu.MemorySpace.VMEM),
            cost_estimate=cost,
        )(lam_arr, x2d)
    elif bytes_per_row > target_block_bytes:
        # A single row exceeds the block budget (very long L): tile 2-D as (8, tile_L).
        tile_l = max(128, (target_block_bytes // (8 * itemsize)) // 128 * 128)
        tile_l = min(tile_l, pl.cdiv(cols, 128) * 128)
        block_rows = min(8, rows)
        block_bytes = block_rows * tile_l * itemsize
        grid = (pl.cdiv(rows, block_rows), pl.cdiv(cols, tile_l))
        out2d = pl.pallas_call(
            _soft_threshold_kernel,
            out_shape=out_shape,
            grid=grid,
            in_specs=[smem_spec,
                      pl.BlockSpec((block_rows, tile_l), lambda i, j: (i, j))],
            out_specs=pl.BlockSpec((block_rows, tile_l), lambda i, j: (i, j)),
            compiler_params=pltpu.CompilerParams(
                dimension_semantics=("parallel", "parallel"),
                vmem_limit_bytes=min(max(4 * block_bytes + (8 << 20), 16 << 20), 48 << 20)),
            cost_estimate=cost,
        )(lam_arr, x2d)
    else:
        # Row-tiled streaming path: multi-MiB (8k, full-L) blocks, grid sharded across cores.
        block_rows = _pick_block_rows(rows, target_block_bytes // bytes_per_row)
        block_bytes = block_rows * bytes_per_row
        grid = (pl.cdiv(rows, block_rows),)
        out2d = pl.pallas_call(
            _soft_threshold_kernel,
            out_shape=out_shape,
            grid=grid,
            in_specs=[smem_spec,
                      pl.BlockSpec((block_rows, cols), lambda i: (i, 0))],
            out_specs=pl.BlockSpec((block_rows, cols), lambda i: (i, 0)),
            compiler_params=pltpu.CompilerParams(
                dimension_semantics=("parallel",),
                vmem_limit_bytes=min(max(4 * block_bytes + (8 << 20), 16 << 20), 48 << 20)),
            cost_estimate=cost,
        )(lam_arr, x2d)

    # Dropout(p=kernel_dropout) with the module default p=0 is the identity at train and eval.
    # TODO(synk): plumb a pltpu.prng_random_bits-based dropout mask if kernel_dropout > 0 is needed.
    return out2d.reshape(C, H, L), None


def _reference(k, lam):
    return jnp.maximum(jnp.abs(k) - lam, 0.0) * jnp.sign(k)


if __name__ == "__main__":
    lam = 0.1
    key = jax.random.PRNGKey(0)
    k0, k1, k2 = jax.random.split(key, 3)

    # 1) Module-consistent small shape: channels=2, H=32, L=128 (causal => N=L),
    #    kernel_params = randn * 0.002  -> exercises the single resident-block path.
    C, H, L = 2, 32, 128
    kp = jax.random.normal(k0, (C, H, L), dtype=jnp.float32) * 0.002
    out, aux = long_conv_kernel_forward(kp, lam=lam)
    out = jax.block_until_ready(out)
    assert aux is None
    assert out.shape == (C, H, L)
    assert jnp.allclose(out, _reference(kp, lam), atol=1e-6), "mismatch (single-block path)"

    # 2) L not a multiple of 128 + tiny block budget -> lane-dense reflow + row-tiled grid path.
    kp2 = jax.random.normal(k1, (2, 64, 200), dtype=jnp.float32)
    out2, _ = long_conv_kernel_forward(kp2, lam=lam, target_block_bytes=8 * 1024)
    out2 = jax.block_until_ready(out2)
    assert jnp.allclose(out2, _reference(kp2, lam), atol=1e-6), "mismatch (row-tiled path)"

    # 3) Single row larger than the block budget -> 2-D (rows, L) tiling path.
    kp3 = jax.random.normal(k2, (2, 8, 1024), dtype=jnp.float32)
    out3, _ = long_conv_kernel_forward(kp3, lam=lam, target_block_bytes=2 * 1024)
    out3 = jax.block_until_ready(out3)
    assert jnp.allclose(out3, _reference(kp3, lam), atol=1e-6), "mismatch (2-D tiled path)"

    print("KERNEL_OK")
</pallas_src>

<mosaic_0001>
module attributes {stable_mosaic.version = 11 : i64} {
  func.func @_soft_threshold_kernel(%arg0: memref<1xf32, #tpu.memory_space<smem>>, %arg1: memref<64x128xf32, #tpu.memory_space<vmem>>, %arg2: memref<64x128xf32, #tpu.memory_space<vmem>>) attributes {dimension_semantics = [], scalar_prefetch = 0 : i64, scratch_operands = 0 : i64, tpu.core_type = #tpu.core_type<tc>} {
    %c0 = arith.constant 0 : index
    %0 = memref.load %arg0[%c0] : memref<1xf32, #tpu.memory_space<smem>>
    %c0_0 = arith.constant 0 : index
    %c0_1 = arith.constant 0 : index
    %1 = vector.load %arg1[%c0_0, %c0_1] : memref<64x128xf32, #tpu.memory_space<vmem>>, vector<64x128xf32>
    %cst = arith.constant 0.000000e+00 : f32
    %2 = arith.subf %cst, %0 : f32
    %3 = vector.broadcast %2 : f32 to vector<64x128xf32>
    %4 = arith.maximumf %3, %1 : vector<64x128xf32>
    %5 = vector.broadcast %0 : f32 to vector<64x128xf32>
    %6 = arith.minimumf %5, %4 : vector<64x128xf32>
    %7 = arith.subf %1, %6 : vector<64x128xf32>
    %c0_2 = arith.constant 0 : index
    %c0_3 = arith.constant 0 : index
    %8 = vector.load %arg2[%c0_2, %c0_3] : memref<64x128xf32, #tpu.memory_space<vmem>>, vector<64x128xf32>
    tpu.vector_store %arg2[%c0_2, %c0_3], %7 {strides = array<i32>} : memref<64x128xf32, #tpu.memory_space<vmem>>, vector<64x128xf32>,
    return
  }
}

</mosaic_0001>

<llo_original>
// kernel: tpu_custom_call.1
$region0: #{tpu_custom_call.1}
  #allocation0 [shape = 'u32[]', space=smem, size = 0x4, offset = 0x4, fixed_abs, tag = 'smem constant byte address 0x4 - core index']
  #allocation1 [shape = 'u32[144,128]{1,0:T(1,128)}', space=vmem, size = 0x12000, scoped, tag = 'internal scratch']
  #allocation2 [shape = 'f32[1]{0:T(128)S(6)}', space=smem, size = 0x200, scoped, tag = 'scoped memory for tpu_custom_call.1']
  %s0 = inlined_call_operand.<no memory space> [shape: f32[1], index: 0, kind: input, shape index: {}]
  %s1 = inlined_call_operand.hbm [shape: f32[64,128], index: 1, kind: input, shape index: {}]
  %s2 = inlined_call_operand.hbm [shape: f32[64,128], index: 2, kind: output, shape index: {}]
  %s3 = sld [smem:[#allocation0]]
  $region22: #{tpu_custom_call.1} parent=0
    _
  %s5 = ssub.s32 1, %s3
  %s6 = scalar_select 0, %s5, %s3
  %7 = sst [smem:[#allocation2]] %s0
  $region1: #{tpu_custom_call.1} parent=0
    #allocation3 [shape = 'u8[32768]{0}', space=vmem, size = 0x8000, scoped, tag = 'input window, operand 1, single buffered']
    #allocation4 [shape = 's32[1]{0}', space=sflag, size = 0x4, scoped, tag = 'scoped memory for tpu_custom_call.1']
    #allocation5 [shape = 's32[1]{0}', space=sflag, size = 0x4, scoped, tag = 'scoped memory for tpu_custom_call.1']
    #allocation6 [shape = 'u8[32768]{0}', space=vmem, size = 0x8000, scoped, tag = 'output window, operand 0, single buffered']
    %8 = vsyncpa [#allocation4], 0
    %9 = vsyncpa [#allocation5], 0
    // Predicated region
    $region2: #{tpu_custom_call.1} parent=1 // pred_check
      _
    $region3: #{tpu_custom_call.1} parent=1 // pred_check_branch
      %11 = sbr.rel (0) target = $region5
    $region4: #{tpu_custom_call.1} parent=1 // pred_region
      _
    $region5: #{tpu_custom_call.1} parent=1 // pred_fallthru
      _
    // Predicated region
    $region6: #{tpu_custom_call.1} parent=1 // pred_check
      _
    $region7: #{tpu_custom_call.1} parent=1 // pred_check_branch
      %13 = sbr.rel (0) target = $region9
    $region8: #{tpu_custom_call.1} parent=1 // pred_region
      %s15 = ssub.s32 1024, 1024
      %16 = vsyncadd [#allocation4], %s15
      %s17 = sshll.u32 [#allocation3], 4
      %s18 = int_to_ptr.vmem [resolvable:$true] %s17
      %23 = dma.hbm_to_vmem [thread:$0]  %s1, 1024, %s18, [#allocation4], 128, 128, 8
    $region9: #{tpu_custom_call.1} parent=1 // pred_fallthru
      _
    // Predicated region
    $region10: #{tpu_custom_call.1} parent=1 // pred_check
      _
    $region11: #{tpu_custom_call.1} parent=1 // pred_check_branch
      %25 = sbr.rel (0) target = $region13
    $region12: #{tpu_custom_call.1} parent=1 // pred_region
      %26 = dma.done [#allocation4], 1024
    $region13: #{tpu_custom_call.1} parent=1 // pred_fallthru
      _
    %s27 = sld [smem:[#allocation2]]
    %v28 = vld [vmem:[#allocation3] sm:$0xff]
    %v29 = vld [vmem:[#allocation3 + $0x8] sm:$0xff]
    %v30 = vld [vmem:[#allocation3 + $0x10] sm:$0xff]
    %v31 = vld [vmem:[#allocation3 + $0x18] sm:$0xff]
    %v32 = vld [vmem:[#allocation3 + $0x20] sm:$0xff]
    %v33 = vld [vmem:[#allocation3 + $0x28] sm:$0xff]
    %v34 = vld [vmem:[#allocation3 + $0x30] sm:$0xff]
    %v35 = vld [vmem:[#allocation3 + $0x38] sm:$0xff]
    %s36 = ssub.f32 0.0, %s27
    %v37 = vstv %s36
    %v38 = vmax.f32 %v37, %v28
    %v39 = vmax.f32 %v37, %v29
    %v40 = vmax.f32 %v37, %v30
    %v41 = vmax.f32 %v37, %v31
    %v42 = vmax.f32 %v37, %v32
    %v43 = vmax.f32 %v37, %v33
    %v44 = vmax.f32 %v37, %v34
    %v45 = vmax.f32 %v37, %v35
    %v46 = vstv %s27
    %v47 = vmin.f32 %v46, %v38
    %v48 = vmin.f32 %v46, %v39
    %v49 = vmin.f32 %v46, %v40
    %v50 = vmin.f32 %v46, %v41
    %v51 = vmin.f32 %v46, %v42
    %v52 = vmin.f32 %v46, %v43
    %v53 = vmin.f32 %v46, %v44
    %v54 = vmin.f32 %v46, %v45
    %v55 = vsub.f32 %v28, %v47
    %v56 = vsub.f32 %v29, %v48
    %v57 = vsub.f32 %v30, %v49
    %v58 = vsub.f32 %v31, %v50
    %v59 = vsub.f32 %v32, %v51
    %v60 = vsub.f32 %v33, %v52
    %v61 = vsub.f32 %v34, %v53
    %v62 = vsub.f32 %v35, %v54
    %63 = vst [vmem:[#allocation6] sm:$0xff] %v55
    %64 = vst [vmem:[#allocation6 + $0x8] sm:$0xff] %v56
    %65 = vst [vmem:[#allocation6 + $0x10] sm:$0xff] %v57
    %66 = vst [vmem:[#allocation6 + $0x18] sm:$0xff] %v58
    %67 = vst [vmem:[#allocation6 + $0x20] sm:$0xff] %v59
    %68 = vst [vmem:[#allocation6 + $0x28] sm:$0xff] %v60
    %69 = vst [vmem:[#allocation6 + $0x30] sm:$0xff] %v61
    %70 = vst [vmem:[#allocation6 + $0x38] sm:$0xff] %v62
    // Predicated region
    $region14: #{tpu_custom_call.1} parent=1 // pred_check
      _
    $region15: #{tpu_custom_call.1} parent=1 // pred_check_branch
      %72 = sbr.rel (0) target = $region17
    $region16: #{tpu_custom_call.1} parent=1 // pred_region
      %s74 = ssub.s32 1024, 1024
      %75 = vsyncadd [#allocation5], %s74
      %s76 = sshll.u32 [#allocation6], 4
      %s77 = int_to_ptr.vmem [resolvable:$true] %s76
      %82 = dma.vmem_to_hbm [thread:$0]  %s77, 1024, %s2, [#allocation5], 128, 128, 8
    $region17: #{tpu_custom_call.1} parent=1 // pred_fallthru
      _
    // Predicated region
    $region18: #{tpu_custom_call.1} parent=1 // pred_check
      _
    $region19: #{tpu_custom_call.1} parent=1 // pred_check_branch
      %84 = sbr.rel (0) target = $region21
    $region20: #{tpu_custom_call.1} parent=1 // pred_region
      %85 = dma.done [#allocation5], 1024
    $region21: #{tpu_custom_call.1} parent=1 // pred_fallthru
      _
    %86 = vsyncpa [#allocation4], 1
    %87 = vsyncpa [#allocation5], 1

</llo_original>
